<compile_context>
chip_gen: v7x
topology: tpu7x:2x2x1
jax: 0.10.0
libtpu: 0.0.40
codegen_flags: <defaults>
</compile_context>

<pallas_src>
import jax
import jax.numpy as jnp
from jax.experimental import pallas as pl
from jax.experimental.pallas import tpu as pltpu


# -----------------------------------------------------------------------------
# Kernels
# -----------------------------------------------------------------------------
def _fused_combine_kernel(x_ref, w_ref, b_ref, out_ref):
    """One (bm, K) x (K, n_tile) MXU matmul + bias; f32 accumulation."""
    acc = jnp.dot(x_ref[...], w_ref[...], preferred_element_type=jnp.float32)
    out_ref[...] = (acc + b_ref[...]).astype(out_ref.dtype)


def _split_combine_kernel(img_ref, txt_ref, w_img_ref, w_txt_ref, b_ref, out_ref):
    """Concat-free form: two dots accumulate into one f32 acc (== concat @ W)."""
    acc = jnp.dot(img_ref[...], w_img_ref[...], preferred_element_type=jnp.float32)
    acc = acc + jnp.dot(txt_ref[...], w_txt_ref[...], preferred_element_type=jnp.float32)
    out_ref[...] = (acc + b_ref[...]).astype(out_ref.dtype)


# -----------------------------------------------------------------------------
# One-time (module-init style) parameter preparation
# -----------------------------------------------------------------------------
def prepare_combine_params(weight, bias, f_img, *, compute_dtype=jnp.bfloat16):
    """torch Linear stores (out, in); pre-transpose to (in, out), cast to bf16."""
    w_in_out = jnp.asarray(weight).T.astype(compute_dtype)          # (K, N)
    b_row = jnp.asarray(bias).reshape(1, -1).astype(jnp.float32)    # (1, N)
    return {
        "w_full": w_in_out,              # (F_img + F_txt, N) — fused small-M path
        "w_img": w_in_out[:f_img],       # (F_img, N)          — split large-M path
        "w_txt": w_in_out[f_img:],       # (F_txt, N)
        "b_row": b_row,                  # (1, N)
    }


# -----------------------------------------------------------------------------
# Wrapper
# -----------------------------------------------------------------------------
def _row_tile_and_vmem(m, n, f_img, f_txt, out_dtype):
    """Generation-safe row tile + explicit scoped-VMEM budget."""
    out_bytes = jnp.dtype(out_dtype).itemsize
    bm = 2048 if out_bytes <= 2 else 1024      # bf16 out -> bigger tile
    bm = min(bm, m)
    # double-buffered output + activations, weight/bias counted twice (resident)
    need = (2 * bm * n * out_bytes
            + 2 * bm * (f_img + f_txt) * 2
            + 2 * (f_img + f_txt) * n * 2
            + 2 * n * 4)
    vmem_limit = int(min(need + (8 << 20), 32 << 20))   # safe on v5e/v6e/v7x
    return bm, vmem_limit


def combine_embeddings_linear(image_emb, text_emb, params, *,
                              compute_dtype=jnp.bfloat16,
                              small_out_dtype=jnp.float32,
                              large_out_dtype=jnp.bfloat16,
                              small_m_threshold=512,
                              n_split=1):
    """
    image_emb: (B, S, F_img)  -- image_encoder(...).last_hidden_state[:, 0:8, :]
    text_emb:  (B, S, F_txt)  -- text_encoder(...).last_hidden_state
    params:    output of prepare_combine_params
    returns:   (B, S, N)
    """
    B, S, F_img = image_emb.shape
    B2, S2, F_txt = text_emb.shape
    assert (B, S) == (B2, S2), "image/text embeddings must share (batch, seq)"
    w_full, b_row = params["w_full"], params["b_row"]
    K, N = w_full.shape
    assert K == F_img + F_txt
    assert N % 128 == 0, "output feature dim must be lane-aligned"
    M = B * S

    if M <= small_m_threshold:
        # ------------------ small-M (real VQA shape) path ------------------
        # Whole problem fits VMEM many times over; one kernel call, single
        # fused K-contraction (better MXU fill than two K/2 dots).  The tiny
        # wrapper concat is free at this size.
        out_dtype = small_out_dtype
        x = jnp.concatenate(
            [image_emb.reshape(M, F_img), text_emb.reshape(M, F_txt)], axis=-1
        ).astype(compute_dtype)

        assert N % (128 * n_split) == 0
        nt = N // n_split
        cost = pl.CostEstimate(
            flops=2 * M * K * N, transcendentals=0,
            bytes_accessed=(x.size * x.dtype.itemsize
                            + w_full.size * w_full.dtype.itemsize
                            + b_row.size * b_row.dtype.itemsize
                            + M * N * jnp.dtype(out_dtype).itemsize))

        out2d = pl.pallas_call(
            _fused_combine_kernel,
            out_shape=jax.ShapeDtypeStruct((M, N), out_dtype),
            grid_spec=pl.GridSpec(
                grid=(n_split,),
                in_specs=[
                    pl.BlockSpec((M, K), lambda j: (0, 0)),   # activations
                    pl.BlockSpec((K, nt), lambda j: (0, j)),  # weight column tile
                    pl.BlockSpec((1, nt), lambda j: (0, j)),  # bias
                ],
                out_specs=pl.BlockSpec((M, nt), lambda j: (0, j)),
            ),
            compiler_params=pltpu.CompilerParams(
                dimension_semantics=("parallel",)),
            cost_estimate=cost,
        )(x, w_full, b_row)
        return out2d.reshape(B, S, N)

    # ---------------------- large-M (hypothetical) path ----------------------
    # No wrapper concat (saves a full HBM round trip of the activations),
    # bf16 output (the f32 store dominated HBM traffic), generation-aware bm.
    out_dtype = large_out_dtype
    img2d = image_emb.reshape(M, F_img).astype(compute_dtype)
    txt2d = text_emb.reshape(M, F_txt).astype(compute_dtype)
    w_img, w_txt = params["w_img"], params["w_txt"]

    bm, vmem_limit = _row_tile_and_vmem(M, N, F_img, F_txt, out_dtype)
    grid = (pl.cdiv(M, bm),)

    cost = pl.CostEstimate(
        flops=2 * M * K * N, transcendentals=0,
        bytes_accessed=(img2d.size * 2 + txt2d.size * 2
                        + w_img.size * 2 + w_txt.size * 2
                        + b_row.size * 4
                        + M * N * jnp.dtype(out_dtype).itemsize))

    out2d = pl.pallas_call(
        _split_combine_kernel,
        out_shape=jax.ShapeDtypeStruct((M, N), out_dtype),
        grid_spec=pl.GridSpec(
            grid=grid,
            in_specs=[
                pl.BlockSpec((bm, F_img), lambda i: (i, 0)),   # image rows
                pl.BlockSpec((bm, F_txt), lambda i: (i, 0)),   # text rows
                pl.BlockSpec((F_img, N), lambda i: (0, 0)),    # resident weight
                pl.BlockSpec((F_txt, N), lambda i: (0, 0)),    # resident weight
                pl.BlockSpec((1, N), lambda i: (0, 0)),        # resident bias
            ],
            out_specs=pl.BlockSpec((bm, N), lambda i: (i, 0)),
        ),
        compiler_params=pltpu.CompilerParams(
            dimension_semantics=("parallel",),
            vmem_limit_bytes=vmem_limit),
        cost_estimate=cost,
    )(img2d, txt2d, w_img, w_txt, b_row)
    return out2d.reshape(B, S, N)


# -----------------------------------------------------------------------------
# Demo / correctness check
# -----------------------------------------------------------------------------
if __name__ == "__main__":
    S = 8                       # forced by [:, 0:8, :] + concat along dim=2
    F_IMG = 64                  # image_encoder_num_features
    F_TXT = 64                  # text_encoder_num_features
    N_OUT = 768                 # hardcoded nn.Linear(..., 768)

    key = jax.random.PRNGKey(0)
    k_img, k_txt, k_w, k_b, k_img2, k_txt2 = jax.random.split(key, 6)

    # torch Linear layout: (out, in)
    weight = (jax.random.normal(k_w, (N_OUT, F_IMG + F_TXT), dtype=jnp.float32)
              * (1.0 / jnp.sqrt(F_IMG + F_TXT)))
    bias = jax.random.normal(k_b, (N_OUT,), dtype=jnp.float32) * 0.01
    params = prepare_combine_params(weight, bias, F_IMG)   # one-time prep

    def reference(img, txt, *, tight):
        concat = jnp.concatenate([img, txt], axis=2)
        x2d = concat.reshape(-1, F_IMG + F_TXT)
        if tight:
            # bf16-quantized operands, true f32 math (HIGHEST precision oracle)
            xq = x2d.astype(jnp.bfloat16).astype(jnp.float32)
            wq = params["w_full"].astype(jnp.float32)
            out = jnp.dot(xq, wq, precision=jax.lax.Precision.HIGHEST) + bias
        else:
            out = jnp.dot(x2d, weight.T,
                          precision=jax.lax.Precision.HIGHEST) + bias
        return out.reshape(img.shape[0], -1, N_OUT)

    # --- 1. Real VQA shape: small-M fused path (M = B*8 = 16, f32 out) ------
    B = 2
    image_embeddings = jax.random.normal(k_img, (B, S, F_IMG), dtype=jnp.float32)
    question_text_embeddings = jax.random.normal(k_txt, (B, S, F_TXT), dtype=jnp.float32)

    combine = combine_embeddings_linear(image_embeddings,
                                        question_text_embeddings, params)
    combine = jax.block_until_ready(combine)
    assert combine.shape == (B, S, N_OUT)
    ref_q = reference(image_embeddings, question_text_embeddings, tight=True)
    ref_f = reference(image_embeddings, question_text_embeddings, tight=False)
    assert jnp.allclose(combine, ref_q, atol=2e-3, rtol=2e-3), "small-M: bf16-oracle mismatch"
    assert jnp.allclose(combine, ref_f, atol=1e-1, rtol=1e-1), "small-M: f32 ref mismatch"

    # --- 2. Large-batch shape: split-input, bf16-out, row-tiled path --------
    B_L = 128                   # M = 1024 > small_m_threshold
    image_l = jax.random.normal(k_img2, (B_L, S, F_IMG), dtype=jnp.float32)
    text_l = jax.random.normal(k_txt2, (B_L, S, F_TXT), dtype=jnp.float32)

    combine_l = combine_embeddings_linear(image_l, text_l, params)
    combine_l = jax.block_until_ready(combine_l)
    assert combine_l.shape == (B_L, S, N_OUT)
    assert combine_l.dtype == jnp.bfloat16
    ref_ql = reference(image_l, text_l, tight=True)
    assert jnp.allclose(combine_l.astype(jnp.float32), ref_ql,
                        atol=3e-2, rtol=3e-2), "large-M: bf16-oracle mismatch"

    print("KERNEL_OK")
</pallas_src>

<mosaic_0001>
module attributes {stable_mosaic.version = 11 : i64} {
  func.func @_fused_combine_kernel(%arg0: i32, %arg1: memref<16x128xbf16, #tpu.memory_space<vmem>>, %arg2: memref<128x768xbf16, #tpu.memory_space<vmem>>, %arg3: memref<1x768xf32, #tpu.memory_space<vmem>>, %arg4: memref<16x768xf32, #tpu.memory_space<vmem>>) attributes {dimension_semantics = [#tpu.dimension_semantics<parallel>], iteration_bounds = array<i64: 1>, scalar_prefetch = 0 : i64, scratch_operands = 0 : i64, tpu.core_type = #tpu.core_type<tc>, window_params = [{pipeline_mode = #tpu.pipeline_mode<synchronous>, transform_indices = @transform_0, window_bounds = array<i64: 16, 128>}, {transform_indices = @transform_1, window_bounds = array<i64: 128, 768>}, {transform_indices = @transform_2, window_bounds = array<i64: 1, 768>}, {transform_indices = @transform_3, window_bounds = array<i64: 16, 768>}]} {
    %c0 = arith.constant 0 : index
    %c0_0 = arith.constant 0 : index
    %0 = vector.load %arg1[%c0, %c0_0] : memref<16x128xbf16, #tpu.memory_space<vmem>>, vector<16x128xbf16>
    %c0_1 = arith.constant 0 : index
    %c0_2 = arith.constant 0 : index
    %1 = vector.load %arg2[%c0_1, %c0_2] : memref<128x768xbf16, #tpu.memory_space<vmem>>, vector<128x768xbf16>
    %cst = arith.constant dense<0.000000e+00> : vector<16x768xf32>
    %2 = tpu.matmul %0, %1, %cst {dimension_numbers = #tpu.dot_dimension_numbers<[1], [0], [0], [1], [0, 0, 1, 1], [], []>} : vector<16x128xbf16>, vector<128x768xbf16>, vector<16x768xf32> -> vector<16x768xf32>
    %c0_3 = arith.constant 0 : index
    %c0_4 = arith.constant 0 : index
    %3 = vector.load %arg3[%c0_3, %c0_4] : memref<1x768xf32, #tpu.memory_space<vmem>>, vector<1x768xf32>
    %4 = vector.broadcast %3 : vector<1x768xf32> to vector<16x768xf32>
    %5 = arith.addf %2, %4 : vector<16x768xf32>
    %c0_5 = arith.constant 0 : index
    %c0_6 = arith.constant 0 : index
    %6 = vector.load %arg4[%c0_5, %c0_6] : memref<16x768xf32, #tpu.memory_space<vmem>>, vector<16x768xf32>
    tpu.vector_store %arg4[%c0_5, %c0_6], %5 {strides = array<i32>} : memref<16x768xf32, #tpu.memory_space<vmem>>, vector<16x768xf32>,
    return
  }
  func.func @transform_0(%arg0: i32) -> (i32, i32) {
    %c0_i32 = arith.constant 0 : i32
    %c0_i32_0 = arith.constant 0 : i32
    %c0_i32_1 = arith.constant 0 : i32
    return %c0_i32, %c0_i32_0 : i32, i32
  }
  func.func @transform_1(%arg0: i32) -> (i32, i32) {
    %c0_i32 = arith.constant 0 : i32
    %c0_i32_0 = arith.constant 0 : i32
    return %c0_i32, %arg0 : i32, i32
  }
  func.func @transform_2(%arg0: i32) -> (i32, i32) {
    %c0_i32 = arith.constant 0 : i32
    %c0_i32_0 = arith.constant 0 : i32
    return %c0_i32, %arg0 : i32, i32
  }
  func.func @transform_3(%arg0: i32) -> (i32, i32) {
    %c0_i32 = arith.constant 0 : i32
    %c0_i32_0 = arith.constant 0 : i32
    return %c0_i32, %arg0 : i32, i32
  }
}

</mosaic_0001>

<llo_original>
// kernel: tpu_custom_call.1
$region0: #{tpu_custom_call.1}
  #allocation0 [shape = 'u32[]', space=smem, size = 0x4, offset = 0x4, fixed_abs, tag = 'smem constant byte address 0x4 - core index']
  #allocation1 [shape = 'u32[144,128]{1,0:T(1,128)}', space=vmem, size = 0x12000, scoped, tag = 'internal scratch']
  %s0 = inlined_call_operand.hbm [shape: bf16[16,128], index: 0, kind: input, shape index: {}]
  %s1 = inlined_call_operand.hbm [shape: bf16[128,768], index: 1, kind: input, shape index: {}]
  %s2 = inlined_call_operand.vmem [shape: f32[1,768], index: 2, kind: input, shape index: {}]
  %s3 = inlined_call_operand.hbm [shape: f32[16,768], index: 3, kind: output, shape index: {}]
  %s4 = sld [smem:[#allocation0]]
  $region30: #{tpu_custom_call.1} parent=0
    _
  %s6 = ssub.s32 1, %s4
  %s7 = scalar_select 0, %s6, %s4
  $region1: #{tpu_custom_call.1} parent=0
    #allocation2 [shape = 'u8[4096]{0}', space=vmem, size = 0x1000, scoped, tag = 'input window, operand 0, single buffered']
    #allocation3 [shape = 's32[1]{0}', space=sflag, size = 0x4, scoped, tag = 'scoped memory for tpu_custom_call.1']
    #allocation4 [shape = 's32[1]{0}', space=sflag, size = 0x4, scoped, tag = 'scoped memory for tpu_custom_call.1']
    #allocation5 [shape = 'u8[196608]{0}', space=vmem, size = 0x30000, scoped, tag = 'input window, operand 1, single buffered']
    #allocation6 [shape = 's32[1]{0}', space=sflag, size = 0x4, scoped, tag = 'scoped memory for tpu_custom_call.1']
    #allocation7 [shape = 'u8[49152]{0}', space=vmem, size = 0xc000, scoped, tag = 'output window, operand 0, single buffered']
    %8 = vsyncpa [#allocation3], 0
    %9 = vsyncpa [#allocation6], 0
    %10 = vsyncpa [#allocation4], 0
    // Predicated region
    $region2: #{tpu_custom_call.1} parent=1 // pred_check
      _
    $region3: #{tpu_custom_call.1} parent=1 // pred_check_branch
      %12 = sbr.rel (0) target = $region5
    $region4: #{tpu_custom_call.1} parent=1 // pred_region
      %s14 = ssub.s32 128, 128
      %15 = vsyncadd [#allocation3], %s14
      %s16 = sshll.u32 [#allocation2], 4
      %s17 = int_to_ptr.vmem [resolvable:$true] %s16
      %22 = dma.hbm_to_vmem [thread:$0]  %s0, 128, %s17, [#allocation3], 64, 64, 4
    $region5: #{tpu_custom_call.1} parent=1 // pred_fallthru
      _
    // Predicated region
    $region6: #{tpu_custom_call.1} parent=1 // pred_check
      _
    $region7: #{tpu_custom_call.1} parent=1 // pred_check_branch
      %24 = sbr.rel (0) target = $region9
    $region8: #{tpu_custom_call.1} parent=1 // pred_region
      %s26 = ssub.s32 6144, 6144
      %27 = vsyncadd [#allocation6], %s26
      %s28 = sshll.u32 [#allocation5], 4
      %s29 = int_to_ptr.vmem [resolvable:$true] %s28
      %34 = dma.hbm_to_vmem [thread:$0]  %s1, 6144, %s29, [#allocation6], 384, 384, 24
    $region9: #{tpu_custom_call.1} parent=1 // pred_fallthru
      _
    // Predicated region
    $region10: #{tpu_custom_call.1} parent=1 // pred_check
      _
    $region11: #{tpu_custom_call.1} parent=1 // pred_check_branch
      %36 = sbr.rel (0) target = $region13
    $region12: #{tpu_custom_call.1} parent=1 // pred_region
      _
    $region13: #{tpu_custom_call.1} parent=1 // pred_fallthru
      _
    // Predicated region
    $region14: #{tpu_custom_call.1} parent=1 // pred_check
      _
    $region15: #{tpu_custom_call.1} parent=1 // pred_check_branch
      %38 = sbr.rel (0) target = $region17
    $region16: #{tpu_custom_call.1} parent=1 // pred_region
      %39 = dma.done [#allocation3], 128
    $region17: #{tpu_custom_call.1} parent=1 // pred_fallthru
      _
    // Predicated region
    $region18: #{tpu_custom_call.1} parent=1 // pred_check
      _
    $region19: #{tpu_custom_call.1} parent=1 // pred_check_branch
      %41 = sbr.rel (0) target = $region21
    $region20: #{tpu_custom_call.1} parent=1 // pred_region
      %42 = dma.done [#allocation6], 6144
    $region21: #{tpu_custom_call.1} parent=1 // pred_fallthru
      _
    %v44 = vld [vmem:[#allocation2] sm:$0xf]
    %v45 = vld [vmem:[#allocation2 + $0x4] sm:$0xf]
    %v46 = vld [vmem:[#allocation5] sm:$0xff]
    %v47 = vld [vmem:[#allocation5 + $0x8] sm:$0xff]
    %v48 = vld [vmem:[#allocation5 + $0x10] sm:$0xff]
    %v49 = vld [vmem:[#allocation5 + $0x18] sm:$0xff]
    %v50 = vld [vmem:[#allocation5 + $0x20] sm:$0xff]
    %v51 = vld [vmem:[#allocation5 + $0x28] sm:$0xff]
    %v52 = vld [vmem:[#allocation5 + $0x30] sm:$0xff]
    %v53 = vld [vmem:[#allocation5 + $0x38] sm:$0xff]
    %v54 = vld [vmem:[#allocation5 + $0x40] sm:$0xff]
    %v55 = vld [vmem:[#allocation5 + $0x48] sm:$0xff]
    %v56 = vld [vmem:[#allocation5 + $0x50] sm:$0xff]
    %v57 = vld [vmem:[#allocation5 + $0x58] sm:$0xff]
    %v58 = vld [vmem:[#allocation5 + $0x60] sm:$0xff]
    %v59 = vld [vmem:[#allocation5 + $0x68] sm:$0xff]
    %v60 = vld [vmem:[#allocation5 + $0x70] sm:$0xff]
    %v61 = vld [vmem:[#allocation5 + $0x78] sm:$0xff]
    %v62 = vld [vmem:[#allocation5 + $0x80] sm:$0xff]
    %v63 = vld [vmem:[#allocation5 + $0x88] sm:$0xff]
    %v64 = vld [vmem:[#allocation5 + $0x90] sm:$0xff]
    %v65 = vld [vmem:[#allocation5 + $0x98] sm:$0xff]
    %v66 = vld [vmem:[#allocation5 + $0xa0] sm:$0xff]
    %v67 = vld [vmem:[#allocation5 + $0xa8] sm:$0xff]
    %v68 = vld [vmem:[#allocation5 + $0xb0] sm:$0xff]
    %v69 = vld [vmem:[#allocation5 + $0xb8] sm:$0xff]
    %v70 = vld [vmem:[#allocation5 + $0xc0] sm:$0xff]
    %v71 = vld [vmem:[#allocation5 + $0xc8] sm:$0xff]
    %v72 = vld [vmem:[#allocation5 + $0xd0] sm:$0xff]
    %v73 = vld [vmem:[#allocation5 + $0xd8] sm:$0xff]
    %v74 = vld [vmem:[#allocation5 + $0xe0] sm:$0xff]
    %v75 = vld [vmem:[#allocation5 + $0xe8] sm:$0xff]
    %v76 = vld [vmem:[#allocation5 + $0xf0] sm:$0xff]
    %v77 = vld [vmem:[#allocation5 + $0xf8] sm:$0xff]
    %v78 = vld [vmem:[#allocation5 + $0x100] sm:$0xff]
    %v79 = vld [vmem:[#allocation5 + $0x108] sm:$0xff]
    %v80 = vld [vmem:[#allocation5 + $0x110] sm:$0xff]
    %v81 = vld [vmem:[#allocation5 + $0x118] sm:$0xff]
    %v82 = vld [vmem:[#allocation5 + $0x120] sm:$0xff]
    %v83 = vld [vmem:[#allocation5 + $0x128] sm:$0xff]
    %v84 = vld [vmem:[#allocation5 + $0x130] sm:$0xff]
    %v85 = vld [vmem:[#allocation5 + $0x138] sm:$0xff]
    %v86 = vld [vmem:[#allocation5 + $0x140] sm:$0xff]
    %v87 = vld [vmem:[#allocation5 + $0x148] sm:$0xff]
    %v88 = vld [vmem:[#allocation5 + $0x150] sm:$0xff]
    %v89 = vld [vmem:[#allocation5 + $0x158] sm:$0xff]
    %v90 = vld [vmem:[#allocation5 + $0x160] sm:$0xff]
    %v91 = vld [vmem:[#allocation5 + $0x168] sm:$0xff]
    %v92 = vld [vmem:[#allocation5 + $0x170] sm:$0xff]
    %v93 = vld [vmem:[#allocation5 + $0x178] sm:$0xff]
    %v94 = vld [vmem:[%s2] sm:$0x3f]
    %v96 = vlaneseq
    %v97 = vshrl.u32 %v96, 7
    %v98 = vsub.s32 0, %v97
    %v99 = vrot.slane %v94, %v98
    %v100 = vlaneseq
    %v101 = vshrl.u32 %v100, 7
    %v102 = vsub.s32 1, %v101
    %v103 = vrot.slane %v94, %v102
    %v104 = vlaneseq
    %v105 = vshrl.u32 %v104, 7
    %v106 = vsub.s32 2, %v105
    %v107 = vrot.slane %v94, %v106
    %v108 = vlaneseq
    %v109 = vshrl.u32 %v108, 7
    %v110 = vsub.s32 3, %v109
    %v111 = vrot.slane %v94, %v110
    %v112 = vlaneseq
    %v113 = vshrl.u32 %v112, 7
    %v114 = vsub.s32 4, %v113
    %v115 = vrot.slane %v94, %v114
    %v116 = vlaneseq
    %v117 = vshrl.u32 %v116, 7
    %v118 = vsub.s32 5, %v117
    %v119 = vrot.slane %v94, %v118
    %v128 = vunpack.c.l.b16 %v44
    %v129 = vunpack.c.l.b16 %v45
    %v130 = vpack.c.b16 %v129, %v128
    %v180 = vunpack.c.l.b16 %v46
    %v181 = vunpack.c.h.b16 %v46
    %v182 = vunpack.c.l.b16 %v47
    %v183 = vunpack.c.h.b16 %v47
    %v184 = vunpack.c.l.b16 %v48
    %v185 = vunpack.c.h.b16 %v48
    %v186 = vunpack.c.l.b16 %v49
    %v187 = vunpack.c.h.b16 %v49
    %v188 = vunpack.c.l.b16 %v50
    %v189 = vunpack.c.h.b16 %v50
    %v190 = vunpack.c.l.b16 %v51
    %v191 = vunpack.c.h.b16 %v51
    %v192 = vunpack.c.l.b16 %v52
    %v193 = vunpack.c.h.b16 %v52
    %v194 = vunpack.c.l.b16 %v53
    %v195 = vunpack.c.h.b16 %v53
    %v196 = vunpack.c.l.b16 %v54
    %v197 = vunpack.c.h.b16 %v54
    %v198 = vunpack.c.l.b16 %v55
    %v199 = vunpack.c.h.b16 %v55
    %v200 = vunpack.c.l.b16 %v56
    %v201 = vunpack.c.h.b16 %v56
    %v202 = vunpack.c.l.b16 %v57
    %v203 = vunpack.c.h.b16 %v57
    %v204 = vunpack.c.l.b16 %v58
    %v205 = vunpack.c.h.b16 %v58
    %v206 = vunpack.c.l.b16 %v59
    %v207 = vunpack.c.h.b16 %v59
    %v208 = vunpack.c.l.b16 %v60
    %v209 = vunpack.c.h.b16 %v60
    %v210 = vunpack.c.l.b16 %v61
    %v211 = vunpack.c.h.b16 %v61
    %v212 = vunpack.c.l.b16 %v62
    %v213 = vunpack.c.h.b16 %v62
    %v214 = vunpack.c.l.b16 %v63
    %v215 = vunpack.c.h.b16 %v63
    %v216 = vunpack.c.l.b16 %v64
    %v217 = vunpack.c.h.b16 %v64
    %v218 = vunpack.c.l.b16 %v65
    %v219 = vunpack.c.h.b16 %v65
    %v220 = vunpack.c.l.b16 %v66
    %v221 = vunpack.c.h.b16 %v66
    %v222 = vunpack.c.l.b16 %v67
    %v223 = vunpack.c.h.b16 %v67
    %v224 = vunpack.c.l.b16 %v68
    %v225 = vunpack.c.h.b16 %v68
    %v226 = vunpack.c.l.b16 %v69
    %v227 = vunpack.c.h.b16 %v69
    %v228 = vunpack.c.l.b16 %v70
    %v229 = vunpack.c.h.b16 %v70
    %v230 = vunpack.c.l.b16 %v71
    %v231 = vunpack.c.h.b16 %v71
    %v232 = vunpack.c.l.b16 %v72
    %v233 = vunpack.c.h.b16 %v72
    %v234 = vunpack.c.l.b16 %v73
    %v235 = vunpack.c.h.b16 %v73
    %v236 = vunpack.c.l.b16 %v74
    %v237 = vunpack.c.h.b16 %v74
    %v238 = vunpack.c.l.b16 %v75
    %v239 = vunpack.c.h.b16 %v75
    %v240 = vunpack.c.l.b16 %v76
    %v241 = vunpack.c.h.b16 %v76
    %v242 = vunpack.c.l.b16 %v77
    %v243 = vunpack.c.h.b16 %v77
    %v244 = vunpack.c.l.b16 %v78
    %v245 = vunpack.c.h.b16 %v78
    %v246 = vunpack.c.l.b16 %v79
    %v247 = vunpack.c.h.b16 %v79
    %v248 = vunpack.c.l.b16 %v80
    %v249 = vunpack.c.h.b16 %v80
    %v250 = vunpack.c.l.b16 %v81
    %v251 = vunpack.c.h.b16 %v81
    %v252 = vunpack.c.l.b16 %v82
    %v253 = vunpack.c.h.b16 %v82
    %v254 = vunpack.c.l.b16 %v83
    %v255 = vunpack.c.h.b16 %v83
    %v256 = vunpack.c.l.b16 %v84
    %v257 = vunpack.c.h.b16 %v84
    %v258 = vunpack.c.l.b16 %v85
    %v259 = vunpack.c.h.b16 %v85
    %v260 = vunpack.c.l.b16 %v86
    %v261 = vunpack.c.h.b16 %v86
    %v262 = vunpack.c.l.b16 %v87
    %v263 = vunpack.c.h.b16 %v87
    %v264 = vunpack.c.l.b16 %v88
    %v265 = vunpack.c.h.b16 %v88
    %v266 = vunpack.c.l.b16 %v89
    %v267 = vunpack.c.h.b16 %v89
    %v268 = vunpack.c.l.b16 %v90
    %v269 = vunpack.c.h.b16 %v90
    %v270 = vunpack.c.l.b16 %v91
    %v271 = vunpack.c.h.b16 %v91
    %v272 = vunpack.c.l.b16 %v92
    %v273 = vunpack.c.h.b16 %v92
    %v274 = vunpack.c.l.b16 %v93
    %v275 = vunpack.c.h.b16 %v93
    %v276 = vpack.c.b16 %v186, %v180
    %v277 = vpack.c.b16 %v187, %v181
    %v278 = vpack.c.b16 %v188, %v182
    %v279 = vpack.c.b16 %v189, %v183
    %v280 = vpack.c.b16 %v190, %v184
    %v281 = vpack.c.b16 %v191, %v185
    %v282 = vpack.c.b16 %v198, %v192
    %v283 = vpack.c.b16 %v199, %v193
    %v284 = vpack.c.b16 %v200, %v194
    %v285 = vpack.c.b16 %v201, %v195
    %v286 = vpack.c.b16 %v202, %v196
    %v287 = vpack.c.b16 %v203, %v197
    %v288 = vpack.c.b16 %v210, %v204
    %v289 = vpack.c.b16 %v211, %v205
    %v290 = vpack.c.b16 %v212, %v206
    %v291 = vpack.c.b16 %v213, %v207
    %v292 = vpack.c.b16 %v214, %v208
    %v293 = vpack.c.b16 %v215, %v209
    %v294 = vpack.c.b16 %v222, %v216
    %v295 = vpack.c.b16 %v223, %v217
    %v296 = vpack.c.b16 %v224, %v218
    %v297 = vpack.c.b16 %v225, %v219
    %v298 = vpack.c.b16 %v226, %v220
    %v299 = vpack.c.b16 %v227, %v221
    %v300 = vpack.c.b16 %v234, %v228
    %v301 = vpack.c.b16 %v235, %v229
    %v302 = vpack.c.b16 %v236, %v230
    %v303 = vpack.c.b16 %v237, %v231
    %v304 = vpack.c.b16 %v238, %v232
    %v305 = vpack.c.b16 %v239, %v233
    %v306 = vpack.c.b16 %v246, %v240
    %v307 = vpack.c.b16 %v247, %v241
    %v308 = vpack.c.b16 %v248, %v242
    %v309 = vpack.c.b16 %v249, %v243
    %v310 = vpack.c.b16 %v250, %v244
    %v311 = vpack.c.b16 %v251, %v245
    %v312 = vpack.c.b16 %v258, %v252
    %v313 = vpack.c.b16 %v259, %v253
    %v314 = vpack.c.b16 %v260, %v254
    %v315 = vpack.c.b16 %v261, %v255
    %v316 = vpack.c.b16 %v262, %v256
    %v317 = vpack.c.b16 %v263, %v257
    %v318 = vpack.c.b16 %v270, %v264
    %v319 = vpack.c.b16 %v271, %v265
    %v320 = vpack.c.b16 %v272, %v266
    %v321 = vpack.c.b16 %v273, %v267
    %v322 = vpack.c.b16 %v274, %v268
    %v323 = vpack.c.b16 %v275, %v269
    %372 = vmatprep.subr.bf16.mxu0 %v277
    %373 = vmatpush1.bf16.msra.mxu0 %v276
    %374 = vmatprep.subr.bf16.mxu0 %v283
    %375 = vmatpush1.bf16.msra.mxu0 %v282
    %376 = vmatprep.subr.bf16.mxu0 %v289
    %377 = vmatpush1.bf16.msra.mxu0 %v288
    %378 = vmatprep.subr.bf16.mxu0 %v295
    %379 = vmatpush1.bf16.msra.mxu0 %v294
    %380 = vmatprep.subr.bf16.mxu0 %v301
    %381 = vmatpush1.bf16.msra.mxu0 %v300
    %382 = vmatprep.subr.bf16.mxu0 %v307
    %383 = vmatpush1.bf16.msra.mxu0 %v306
    %384 = vmatprep.subr.bf16.mxu0 %v313
    %385 = vmatpush1.bf16.msra.mxu0 %v312
    %386 = vmatprep.subr.bf16.mxu0 %v319
    %387 = vmatpush1.bf16.msra.mxu0 %v318
    %388 = vmatprep.subr.bf16.mxu0 0
    %389 = vmatpush1.bf16.msra.mxu0 0
    %390 = vmatprep.subr.bf16.mxu0 0
    %391 = vmatpush1.bf16.msra.mxu0 0
    %392 = vmatprep.subr.bf16.mxu0 0
    %393 = vmatpush1.bf16.msra.mxu0 0
    %394 = vmatprep.subr.bf16.mxu0 0
    %395 = vmatpush1.bf16.msra.mxu0 0
    %396 = vmatprep.subr.bf16.mxu0 0
    %397 = vmatpush1.bf16.msra.mxu0 0
    %398 = vmatprep.subr.bf16.mxu0 0
    %399 = vmatpush1.bf16.msra.mxu0 0
    %400 = vmatprep.subr.bf16.mxu0 0
    %401 = vmatpush1.bf16.msra.mxu0 0
    %402 = vmatprep.subr.bf16.mxu0 0
    %403 = vmatpush1.bf16.msra.mxu0 0
    %404 = vmatprep.mubr.bf16.mxu0 0
    %405 = vmatmul.mubr.bf16.gmra.mrb[0].mxu0 %v130
    %v406 = vpop.f32.mrb[0].mxu0
    %v407 = vadd.f32 %v99, %v406
    %v408 = vpop.f32.mrb[0].mxu0
    %v409 = vadd.f32 %v103, %v408
    %v410 = vpop.f32.mrb[0].mxu0
    %v411 = vadd.f32 %v99, %v410
    %v412 = vpop.f32.mrb[0].mxu0
    %v413 = vadd.f32 %v103, %v412
    %414 = vdwg.mxu0
    %415 = vmatprep.subr.bf16.mxu0 %v279
    %416 = vmatpush1.bf16.msra.mxu0 %v278
    %417 = vmatprep.subr.bf16.mxu0 %v285
    %418 = vmatpush1.bf16.msra.mxu0 %v284
    %419 = vmatprep.subr.bf16.mxu0 %v291
    %420 = vmatpush1.bf16.msra.mxu0 %v290
    %421 = vmatprep.subr.bf16.mxu0 %v297
    %422 = vmatpush1.bf16.msra.mxu0 %v296
    %423 = vmatprep.subr.bf16.mxu0 %v303
    %424 = vmatpush1.bf16.msra.mxu0 %v302
    %425 = vmatprep.subr.bf16.mxu0 %v309
    %426 = vmatpush1.bf16.msra.mxu0 %v308
    %427 = vmatprep.subr.bf16.mxu0 %v315
    %428 = vmatpush1.bf16.msra.mxu0 %v314
    %429 = vmatprep.subr.bf16.mxu0 %v321
    %430 = vmatpush1.bf16.msra.mxu0 %v320
    %431 = vmatprep.subr.bf16.mxu0 0
    %432 = vmatpush1.bf16.msra.mxu0 0
    %433 = vmatprep.subr.bf16.mxu0 0
    %434 = vmatpush1.bf16.msra.mxu0 0
    %435 = vmatprep.subr.bf16.mxu0 0
    %436 = vmatpush1.bf16.msra.mxu0 0
    %437 = vmatprep.subr.bf16.mxu0 0
    %438 = vmatpush1.bf16.msra.mxu0 0
    %439 = vmatprep.subr.bf16.mxu0 0
    %440 = vmatpush1.bf16.msra.mxu0 0
    %441 = vmatprep.subr.bf16.mxu0 0
    %442 = vmatpush1.bf16.msra.mxu0 0
    %443 = vmatprep.subr.bf16.mxu0 0
    %444 = vmatpush1.bf16.msra.mxu0 0
    %445 = vmatprep.subr.bf16.mxu0 0
    %446 = vmatpush1.bf16.msra.mxu0 0
    %447 = vmatprep.mubr.bf16.mxu0 0
    %448 = vmatmul.mubr.bf16.gmra.mrb[0].mxu0 %v130
    %v449 = vpop.f32.mrb[0].mxu0
    %v450 = vadd.f32 %v107, %v449
    %v451 = vpop.f32.mrb[0].mxu0
    %v452 = vadd.f32 %v111, %v451
    %v453 = vpop.f32.mrb[0].mxu0
    %v454 = vadd.f32 %v107, %v453
    %v455 = vpop.f32.mrb[0].mxu0
    %v456 = vadd.f32 %v111, %v455
    %457 = vdwg.mxu0
    %458 = vmatprep.subr.bf16.mxu0 %v281
    %459 = vmatpush1.bf16.msra.mxu0 %v280
    %460 = vmatprep.subr.bf16.mxu0 %v287
    %461 = vmatpush1.bf16.msra.mxu0 %v286
    %462 = vmatprep.subr.bf16.mxu0 %v293
    %463 = vmatpush1.bf16.msra.mxu0 %v292
    %464 = vmatprep.subr.bf16.mxu0 %v299
    %465 = vmatpush1.bf16.msra.mxu0 %v298
    %466 = vmatprep.subr.bf16.mxu0 %v305
    %467 = vmatpush1.bf16.msra.mxu0 %v304
    %468 = vmatprep.subr.bf16.mxu0 %v311
    %469 = vmatpush1.bf16.msra.mxu0 %v310
    %470 = vmatprep.subr.bf16.mxu0 %v317
    %471 = vmatpush1.bf16.msra.mxu0 %v316
    %472 = vmatprep.subr.bf16.mxu0 %v323
    %473 = vmatpush1.bf16.msra.mxu0 %v322
    %474 = vmatprep.subr.bf16.mxu0 0
    %475 = vmatpush1.bf16.msra.mxu0 0
    %476 = vmatprep.subr.bf16.mxu0 0
    %477 = vmatpush1.bf16.msra.mxu0 0
    %478 = vmatprep.subr.bf16.mxu0 0
    %479 = vmatpush1.bf16.msra.mxu0 0
    %480 = vmatprep.subr.bf16.mxu0 0
    %481 = vmatpush1.bf16.msra.mxu0 0
    %482 = vmatprep.subr.bf16.mxu0 0
    %483 = vmatpush1.bf16.msra.mxu0 0
    %484 = vmatprep.subr.bf16.mxu0 0
    %485 = vmatpush1.bf16.msra.mxu0 0
    %486 = vmatprep.subr.bf16.mxu0 0
    %487 = vmatpush1.bf16.msra.mxu0 0
    %488 = vmatprep.subr.bf16.mxu0 0
    %489 = vmatpush1.bf16.msra.mxu0 0
    %490 = vmatprep.mubr.bf16.mxu0 0
    %491 = vmatmul.mubr.bf16.gmra.mrb[0].mxu0 %v130
    %v492 = vpop.f32.mrb[0].mxu0
    %v493 = vadd.f32 %v115, %v492
    %v494 = vpop.f32.mrb[0].mxu0
    %v495 = vadd.f32 %v119, %v494
    %v496 = vpop.f32.mrb[0].mxu0
    %v497 = vadd.f32 %v115, %v496
    %v498 = vpop.f32.mrb[0].mxu0
    %v499 = vadd.f32 %v119, %v498
    %500 = vdwg.mxu0
    %501 = vst [vmem:[#allocation7] sm:$0xff] %v407
    %502 = vst [vmem:[#allocation7 + $0x8] sm:$0xff] %v409
    %503 = vst [vmem:[#allocation7 + $0x10] sm:$0xff] %v450
    %504 = vst [vmem:[#allocation7 + $0x18] sm:$0xff] %v452
    %505 = vst [vmem:[#allocation7 + $0x20] sm:$0xff] %v493
    %506 = vst [vmem:[#allocation7 + $0x28] sm:$0xff] %v495
    %507 = vst [vmem:[#allocation7 + $0x30] sm:$0xff] %v411
    %508 = vst [vmem:[#allocation7 + $0x38] sm:$0xff] %v413
    %509 = vst [vmem:[#allocation7 + $0x40] sm:$0xff] %v454
    %510 = vst [vmem:[#allocation7 + $0x48] sm:$0xff] %v456
    %511 = vst [vmem:[#allocation7 + $0x50] sm:$0xff] %v497
    %512 = vst [vmem:[#allocation7 + $0x58] sm:$0xff] %v499
    // Predicated region
    $region22: #{tpu_custom_call.1} parent=1 // pred_check
      _
    $region23: #{tpu_custom_call.1} parent=1 // pred_check_branch
      %514 = sbr.rel (0) target = $region25
    $region24: #{tpu_custom_call.1} parent=1 // pred_region
      %s516 = ssub.s32 1536, 1536
      %517 = vsyncadd [#allocation4], %s516
      %s518 = sshll.u32 [#allocation7], 4
      %s519 = int_to_ptr.vmem [resolvable:$true] %s518
      %524 = dma.vmem_to_hbm [thread:$0]  %s519, 1536, %s3, [#allocation4], 768, 768, 48
    $region25: #{tpu_custom_call.1} parent=1 // pred_fallthru
      _
    // Predicated region
    $region26: #{tpu_custom_call.1} parent=1 // pred_check
      _
    $region27: #{tpu_custom_call.1} parent=1 // pred_check_branch
      %526 = sbr.rel (0) target = $region29
    $region28: #{tpu_custom_call.1} parent=1 // pred_region
      %527 = dma.done [#allocation4], 1536
    $region29: #{tpu_custom_call.1} parent=1 // pred_fallthru
      _
    %528 = vsyncpa [#allocation3], 1
    %529 = vsyncpa [#allocation6], 1
    %530 = vsyncpa [#allocation4], 1

</llo_original>
